<compile_context>
chip_gen: v6e
topology: v6e:2x2x1
jax: 0.10.0
libtpu: 0.0.40
codegen_flags: <defaults>
</compile_context>

<pallas_src>
import functools
import math

import jax
import jax.numpy as jnp
from jax.experimental import pallas as pl
from jax.experimental.pallas import tpu as pltpu


# ----------------------------------------------------------------------------- helpers
def _round_up(x: int, m: int) -> int:
    return ((x + m - 1) // m) * m


def _pad2d(x, rows: int, cols: int):
    r, c = x.shape
    return jnp.pad(x, ((0, rows - r), (0, cols - c)))


def _choose_node_tiling(n: int):
    """Pick (n_pad, tm, tk) so tm | n_pad and tk | n_pad with lane/sublane alignment."""
    if n <= 512:
        n_pad = _round_up(n, 128)
        tm = 128                      # row tile
        tk = n_pad                    # full reduction in one step for small graphs
    else:
        n_pad = _round_up(n, 512)
        tm, tk = 256, 512             # 256x512 bf16 A tile = 256 KiB -> fits all gens
    return n_pad, tm, tk


# ----------------------------------------------------------------------------- kernel
def _sage_layer_kernel(*refs, use_ln: bool, use_act: bool, f_out: int):
    if use_ln:
        (a_ref, h_src_ref, h_self_ref, w_ref, b_ref,
         gamma_ref, beta_ref, o_ref, acc_ref) = refs
    else:
        a_ref, h_src_ref, h_self_ref, w_ref, b_ref, o_ref, acc_ref = refs
        gamma_ref = beta_ref = None

    k = pl.program_id(1)
    nk = pl.num_programs(1)

    @pl.when(k == 0)
    def _():
        acc_ref[...] = jnp.zeros_like(acc_ref)

    # Partial mean aggregation: acc += A_norm[i-tile, k-tile] @ h[k-tile].
    # A is stored bf16 (HBM bandwidth); upcast in VMEM so math stays f32.
    acc_ref[...] += jnp.dot(a_ref[...].astype(jnp.float32), h_src_ref[...],
                            preferred_element_type=jnp.float32)

    @pl.when(k == nk - 1)
    def _():
        ah = acc_ref[...]                                   # [tm, F_in_pad]
        # Single merged contraction over K = 2*F_in_pad (lane-aligned concat).
        hh = jnp.concatenate([h_self_ref[...], ah], axis=-1)
        z = jnp.dot(hh, w_ref[...], preferred_element_type=jnp.float32) + b_ref[...]

        if use_ln:
            # Masked LayerNorm over the first `f_out` (logical) lanes only.
            lane = jax.lax.broadcasted_iota(jnp.int32, z.shape, 1)
            valid = lane < f_out
            inv_f = 1.0 / float(f_out)
            zs = jnp.where(valid, z, 0.0)
            mu = jnp.sum(zs, axis=-1, keepdims=True) * inv_f
            c = jnp.where(valid, z - mu, 0.0)
            var = jnp.sum(c * c, axis=-1, keepdims=True) * inv_f
            z = c * jax.lax.rsqrt(var + 1e-5)
            z = z * gamma_ref[...] + beta_ref[...]

        if use_act:
            z = jnp.maximum(z, 0.0)

        o_ref[...] = z.astype(o_ref.dtype)


# ----------------------------------------------------------------------------- wrapper
def sage_layer(a_norm, h, params, *, tm: int, tk: int, use_ln: bool, use_act: bool):
    """One GraphSAGE layer as a tiled pallas_call (row tiles x A-column reduction)."""
    n_pad = a_norm.shape[0]
    f_in_pad = h.shape[1]
    f_out_pad = params["w"].shape[1]
    assert params["w"].shape[0] == 2 * f_in_pad

    kernel = functools.partial(_sage_layer_kernel, use_ln=use_ln, use_act=use_act,
                               f_out=params["f_out"])

    in_specs = [
        pl.BlockSpec((tm, tk), lambda i, k: (i, k)),              # A_norm (bf16)
        pl.BlockSpec((tk, f_in_pad), lambda i, k: (k, 0)),        # h  (aggregation src)
        pl.BlockSpec((tm, f_in_pad), lambda i, k: (i, 0)),        # h  (self rows)
        pl.BlockSpec((2 * f_in_pad, f_out_pad), lambda i, k: (0, 0)),  # W (resident)
        pl.BlockSpec((1, f_out_pad), lambda i, k: (0, 0)),        # bias
    ]
    args = [a_norm, h, h, params["w"], params["b"]]
    if use_ln:
        in_specs += [pl.BlockSpec((1, f_out_pad), lambda i, k: (0, 0)),
                     pl.BlockSpec((1, f_out_pad), lambda i, k: (0, 0))]
        args += [params["gamma"], params["beta"]]

    return pl.pallas_call(
        kernel,
        out_shape=jax.ShapeDtypeStruct((n_pad, f_out_pad), jnp.float32),
        grid_spec=pltpu.PrefetchScalarGridSpec(
            num_scalar_prefetch=0,
            grid=(n_pad // tm, n_pad // tk),
            in_specs=in_specs,
            out_specs=pl.BlockSpec((tm, f_out_pad), lambda i, k: (i, 0)),
            scratch_shapes=[pltpu.VMEM((tm, f_in_pad), jnp.float32)],
        ),
        compiler_params=pltpu.CompilerParams(
            dimension_semantics=("parallel", "arbitrary"),
            vmem_limit_bytes=32 * 1024 * 1024,   # safe on v5e/v6e (128 MiB) and v7x (64 MiB)
        ),
    )(*args)


def init_layer_params(key, in_feats: int, out_feats: int):
    """Match nn.Linear(2*in_feats, out_feats) + LayerNorm init; pad lanes to 128."""
    k_w, k_b = jax.random.split(key)
    bound = 1.0 / math.sqrt(2.0 * in_feats)
    w_full = jax.random.uniform(k_w, (2 * in_feats, out_feats),
                                minval=-bound, maxval=bound, dtype=jnp.float32)
    b = jax.random.uniform(k_b, (out_feats,),
                           minval=-bound, maxval=bound, dtype=jnp.float32)

    f_in_pad = _round_up(in_feats, 128)
    f_out_pad = _round_up(out_feats, 128)

    # Padded weight laid out for the in-kernel concat(h, ah): rows [0:f_in_pad) = self
    # half, rows [f_in_pad:2*f_in_pad) = neighbor half; padded rows/cols are zero.
    w_pad = jnp.zeros((2 * f_in_pad, f_out_pad), jnp.float32)
    w_pad = w_pad.at[:in_feats, :out_feats].set(w_full[:in_feats])
    w_pad = w_pad.at[f_in_pad:f_in_pad + in_feats, :out_feats].set(w_full[in_feats:])

    b_pad = jnp.zeros((1, f_out_pad), jnp.float32).at[0, :out_feats].set(b)
    gamma_pad = jnp.zeros((1, f_out_pad), jnp.float32).at[0, :out_feats].set(1.0)
    beta_pad = jnp.zeros((1, f_out_pad), jnp.float32)

    return dict(w=w_pad, b=b_pad, gamma=gamma_pad, beta=beta_pad,
                f_in=in_feats, f_out=out_feats,
                f_in_pad=f_in_pad, f_out_pad=f_out_pad)


def _normalized_adjacency(adj):
    """A_norm = (1/in_deg) * A, 0 where in_deg==0; stored bf16 (layer-invariant)."""
    in_deg = jnp.sum(adj, axis=1, keepdims=True)
    norm = jnp.where(in_deg > 0, 1.0 / jnp.maximum(in_deg, 1.0), 0.0)
    return (adj * norm).astype(jnp.bfloat16)


def graphsage_forward(adj, features, params_list):
    """Stack of GraphSAGE layers; all but the last use LayerNorm + ReLU."""
    n = adj.shape[0]
    f_in = features.shape[1]
    n_pad, tm, tk = _choose_node_tiling(n)

    a_norm = _pad2d(_normalized_adjacency(adj), n_pad, n_pad)
    h = _pad2d(features.astype(jnp.float32), n_pad, _round_up(f_in, 128))

    n_layers = len(params_list)
    for li, p in enumerate(params_list):
        last = li == n_layers - 1
        h = sage_layer(a_norm, h, p, tm=tm, tk=tk, use_ln=not last, use_act=not last)

    return h[:n, :params_list[-1]["f_out"]]


# Pure-JAX reference (same bf16-rounded normalized adjacency) for validation.
def _reference_forward(adj, features, params_list):
    a = _normalized_adjacency(adj).astype(jnp.float32)
    h = features.astype(jnp.float32)
    nl = len(params_list)
    for i, p in enumerate(params_list):
        f_in, f_out, f_in_pad = p["f_in"], p["f_out"], p["f_in_pad"]
        w_self = p["w"][:f_in, :f_out]
        w_neigh = p["w"][f_in_pad:f_in_pad + f_in, :f_out]
        b = p["b"][0, :f_out]
        ah = a @ h
        z = h @ w_self + ah @ w_neigh + b
        if i < nl - 1:
            mu = jnp.mean(z, axis=-1, keepdims=True)
            var = jnp.mean((z - mu) ** 2, axis=-1, keepdims=True)
            z = (z - mu) * jax.lax.rsqrt(var + 1e-5)
            z = z * p["gamma"][0, :f_out] + p["beta"][0, :f_out]
            z = jnp.maximum(z, 0.0)
        h = z
    return h


if __name__ == "__main__":
    # Small, TPU-friendly shapes.
    N = 16            # nodes
    IN_FEATS = 32
    N_HIDDEN = 32
    N_CLASSES = 8
    N_LAYERS = 2      # GraphSAGE builds n_layers + 1 GraphSAGELayer modules

    key = jax.random.PRNGKey(0)
    k_adj, k_feat, k_p0, k_p1, k_p2 = jax.random.split(key, 5)

    # Deterministic random graph (dense adjacency, A[dst, src]).
    adj = (jax.random.uniform(k_adj, (N, N)) < 0.3).astype(jnp.float32)
    features = jax.random.normal(k_feat, (N, IN_FEATS), dtype=jnp.float32)

    # Layer stack: in->hidden (ln+relu), hidden->hidden (ln+relu), hidden->classes (plain).
    params = [
        init_layer_params(k_p0, IN_FEATS, N_HIDDEN),
        init_layer_params(k_p1, N_HIDDEN, N_HIDDEN),
        init_layer_params(k_p2, N_HIDDEN, N_CLASSES),
    ]
    # TODO(synk): dropout is disabled (p=0.0, eval mode) and the 'pool'/'lstm'/'attn'/'gcn'
    # aggregators are not implemented; this covers the 'mean' aggregator path.

    out = graphsage_forward(adj, features, params)
    jax.block_until_ready(out)
    assert out.shape == (N, N_CLASSES)

    ref = _reference_forward(adj, features, params)
    assert jnp.all(jnp.isfinite(out))
    assert jnp.allclose(out, ref, rtol=1e-2, atol=1e-2), "mismatch vs pure-JAX reference"

    print("KERNEL_OK")
</pallas_src>

<mosaic_0001>
module attributes {stable_mosaic.version = 11 : i64} {
  func.func @_sage_layer_kernel(%arg0: i32, %arg1: i32, %arg2: memref<128x128xbf16, #tpu.memory_space<vmem>>, %arg3: memref<128x128xf32, #tpu.memory_space<vmem>>, %arg4: memref<128x128xf32, #tpu.memory_space<vmem>>, %arg5: memref<256x128xf32, #tpu.memory_space<vmem>>, %arg6: memref<1x128xf32, #tpu.memory_space<vmem>>, %arg7: memref<1x128xf32, #tpu.memory_space<vmem>>, %arg8: memref<1x128xf32, #tpu.memory_space<vmem>>, %arg9: memref<128x128xf32, #tpu.memory_space<vmem>>, %arg10: memref<128x128xf32, #tpu.memory_space<vmem>>) attributes {dimension_semantics = [#tpu.dimension_semantics<parallel>, #tpu.dimension_semantics<arbitrary>], iteration_bounds = array<i64: 1, 1>, scalar_prefetch = 0 : i64, scratch_operands = 1 : i64, tpu.core_type = #tpu.core_type<tc>, window_params = [{transform_indices = @transform_0, window_bounds = array<i64: 128, 128>}, {transform_indices = @transform_1, window_bounds = array<i64: 128, 128>}, {transform_indices = @transform_2, window_bounds = array<i64: 128, 128>}, {pipeline_mode = #tpu.pipeline_mode<synchronous>, transform_indices = @transform_3, window_bounds = array<i64: 256, 128>}, {pipeline_mode = #tpu.pipeline_mode<synchronous>, transform_indices = @transform_4, window_bounds = array<i64: 1, 128>}, {pipeline_mode = #tpu.pipeline_mode<synchronous>, transform_indices = @transform_5, window_bounds = array<i64: 1, 128>}, {pipeline_mode = #tpu.pipeline_mode<synchronous>, transform_indices = @transform_6, window_bounds = array<i64: 1, 128>}, {transform_indices = @transform_7, window_bounds = array<i64: 128, 128>}]} {
    %c0_i32 = arith.constant 0 : i32
    %0 = arith.cmpi eq, %arg1, %c0_i32 : i32
    %1 = arith.extui %0 : i1 to i32
    %c0_i32_0 = arith.constant 0 : i32
    %2 = arith.cmpi ne, %1, %c0_i32_0 : i32
    scf.if %2 {
      %cst_10 = arith.constant 0.000000e+00 : f32
      %13 = vector.broadcast %cst_10 : f32 to vector<128x128xf32>
      %c0_11 = arith.constant 0 : index
      %c0_12 = arith.constant 0 : index
      %14 = vector.load %arg10[%c0_11, %c0_12] : memref<128x128xf32, #tpu.memory_space<vmem>>, vector<128x128xf32>
      tpu.vector_store %arg10[%c0_11, %c0_12], %13 {strides = array<i32>} : memref<128x128xf32, #tpu.memory_space<vmem>>, vector<128x128xf32>,
    } else {
    }
    %c0 = arith.constant 0 : index
    %c0_1 = arith.constant 0 : index
    %3 = vector.load %arg10[%c0, %c0_1] : memref<128x128xf32, #tpu.memory_space<vmem>>, vector<128x128xf32>
    %c0_2 = arith.constant 0 : index
    %c0_3 = arith.constant 0 : index
    %4 = vector.load %arg2[%c0_2, %c0_3] : memref<128x128xbf16, #tpu.memory_space<vmem>>, vector<128x128xbf16>
    %5 = arith.extf %4 : vector<128x128xbf16> to vector<128x128xf32>
    %c0_4 = arith.constant 0 : index
    %c0_5 = arith.constant 0 : index
    %6 = vector.load %arg3[%c0_4, %c0_5] : memref<128x128xf32, #tpu.memory_space<vmem>>, vector<128x128xf32>
    %cst = arith.constant dense<0.000000e+00> : vector<128x128xf32>
    %7 = tpu.matmul %5, %6, %cst {dimension_numbers = #tpu.dot_dimension_numbers<[1], [0], [0], [1], [0, 0, 1, 1], [], []>} : vector<128x128xf32>, vector<128x128xf32>, vector<128x128xf32> -> vector<128x128xf32>
    %8 = arith.addf %3, %7 : vector<128x128xf32>
    %c0_6 = arith.constant 0 : index
    %c0_7 = arith.constant 0 : index
    %9 = vector.load %arg10[%c0_6, %c0_7] : memref<128x128xf32, #tpu.memory_space<vmem>>, vector<128x128xf32>
    tpu.vector_store %arg10[%c0_6, %c0_7], %8 {strides = array<i32>} : memref<128x128xf32, #tpu.memory_space<vmem>>, vector<128x128xf32>,
    %c0_i32_8 = arith.constant 0 : i32
    %10 = arith.cmpi eq, %arg1, %c0_i32_8 : i32
    %11 = arith.extui %10 : i1 to i32
    %c0_i32_9 = arith.constant 0 : i32
    %12 = arith.cmpi ne, %11, %c0_i32_9 : i32
    scf.if %12 {
      %c0_10 = arith.constant 0 : index
      %c0_11 = arith.constant 0 : index
      %13 = vector.load %arg10[%c0_10, %c0_11] : memref<128x128xf32, #tpu.memory_space<vmem>>, vector<128x128xf32>
      %c0_12 = arith.constant 0 : index
      %c0_13 = arith.constant 0 : index
      %14 = vector.load %arg4[%c0_12, %c0_13] : memref<128x128xf32, #tpu.memory_space<vmem>>, vector<128x128xf32>
      %15 = tpu.concatenate %14, %13 in 1 : vector<128x128xf32>, vector<128x128xf32> -> vector<128x256xf32>
      %c0_14 = arith.constant 0 : index
      %c0_15 = arith.constant 0 : index
      %16 = vector.load %arg5[%c0_14, %c0_15] : memref<256x128xf32, #tpu.memory_space<vmem>>, vector<256x128xf32>
      %cst_16 = arith.constant dense<0.000000e+00> : vector<128x128xf32>
      %17 = tpu.matmul %15, %16, %cst_16 {dimension_numbers = #tpu.dot_dimension_numbers<[1], [0], [0], [1], [0, 0, 1, 1], [], []>} : vector<128x256xf32>, vector<256x128xf32>, vector<128x128xf32> -> vector<128x128xf32>
      %c0_17 = arith.constant 0 : index
      %c0_18 = arith.constant 0 : index
      %18 = vector.load %arg6[%c0_17, %c0_18] : memref<1x128xf32, #tpu.memory_space<vmem>>, vector<1x128xf32>
      %19 = vector.broadcast %18 : vector<1x128xf32> to vector<128x128xf32>
      %20 = arith.addf %17, %19 : vector<128x128xf32>
      %21 = tpu.iota {dimensions = array<i32: 1>} : vector<128x128xi32>
      %c32_i32 = arith.constant 32 : i32
      %22 = vector.broadcast %c32_i32 : i32 to vector<128x128xi32>
      %23 = arith.cmpi slt, %21, %22 : vector<128x128xi32>
      %cst_19 = arith.constant 0.000000e+00 : f32
      %24 = vector.broadcast %cst_19 : f32 to vector<128x128xf32>
      %25 = arith.select %23, %20, %24 : vector<128x128xi1>, vector<128x128xf32>
      %cst_20 = arith.constant dense<0.000000e+00> : vector<128xf32>
      %26 = vector.multi_reduction <add>, %25, %cst_20 [1] : vector<128x128xf32> to vector<128xf32>
      %27 = vector.shape_cast %26 : vector<128xf32> to vector<128x1xf32>
      %cst_21 = arith.constant 3.125000e-02 : f32
      %28 = vector.broadcast %cst_21 : f32 to vector<128x1xf32>
      %29 = arith.mulf %27, %28 : vector<128x1xf32>
      %30 = vector.broadcast %29 : vector<128x1xf32> to vector<128x128xf32>
      %31 = arith.subf %20, %30 : vector<128x128xf32>
      %cst_22 = arith.constant 0.000000e+00 : f32
      %32 = vector.broadcast %cst_22 : f32 to vector<128x128xf32>
      %33 = arith.select %23, %31, %32 : vector<128x128xi1>, vector<128x128xf32>
      %34 = arith.mulf %33, %33 : vector<128x128xf32>
      %cst_23 = arith.constant dense<0.000000e+00> : vector<128xf32>
      %35 = vector.multi_reduction <add>, %34, %cst_23 [1] : vector<128x128xf32> to vector<128xf32>
      %36 = vector.shape_cast %35 : vector<128xf32> to vector<128x1xf32>
      %cst_24 = arith.constant 3.125000e-02 : f32
      %37 = vector.broadcast %cst_24 : f32 to vector<128x1xf32>
      %38 = arith.mulf %36, %37 : vector<128x1xf32>
      %cst_25 = arith.constant 9.99999974E-6 : f32
      %39 = vector.broadcast %cst_25 : f32 to vector<128x1xf32>
      %40 = arith.addf %38, %39 : vector<128x1xf32>
      %41 = math.rsqrt %40 : vector<128x1xf32>
      %42 = vector.broadcast %41 : vector<128x1xf32> to vector<128x128xf32>
      %43 = arith.mulf %33, %42 : vector<128x128xf32>
      %c0_26 = arith.constant 0 : index
      %c0_27 = arith.constant 0 : index
      %44 = vector.load %arg7[%c0_26, %c0_27] : memref<1x128xf32, #tpu.memory_space<vmem>>, vector<1x128xf32>
      %45 = vector.broadcast %44 : vector<1x128xf32> to vector<128x128xf32>
      %46 = arith.mulf %43, %45 : vector<128x128xf32>
      %c0_28 = arith.constant 0 : index
      %c0_29 = arith.constant 0 : index
      %47 = vector.load %arg8[%c0_28, %c0_29] : memref<1x128xf32, #tpu.memory_space<vmem>>, vector<1x128xf32>
      %48 = vector.broadcast %47 : vector<1x128xf32> to vector<128x128xf32>
      %49 = arith.addf %46, %48 : vector<128x128xf32>
      %cst_30 = arith.constant 0.000000e+00 : f32
      %50 = vector.broadcast %cst_30 : f32 to vector<128x128xf32>
      %51 = arith.maximumf %49, %50 : vector<128x128xf32>
      %c0_31 = arith.constant 0 : index
      %c0_32 = arith.constant 0 : index
      %52 = vector.load %arg9[%c0_31, %c0_32] : memref<128x128xf32, #tpu.memory_space<vmem>>, vector<128x128xf32>
      tpu.vector_store %arg9[%c0_31, %c0_32], %51 {strides = array<i32>} : memref<128x128xf32, #tpu.memory_space<vmem>>, vector<128x128xf32>,
    } else {
    }
    return
  }
  func.func @transform_0(%arg0: i32, %arg1: i32) -> (i32, i32) {
    %c0_i32 = arith.constant 0 : i32
    return %arg0, %arg1 : i32, i32
  }
  func.func @transform_1(%arg0: i32, %arg1: i32) -> (i32, i32) {
    %c0_i32 = arith.constant 0 : i32
    %c0_i32_0 = arith.constant 0 : i32
    return %arg1, %c0_i32 : i32, i32
  }
  func.func @transform_2(%arg0: i32, %arg1: i32) -> (i32, i32) {
    %c0_i32 = arith.constant 0 : i32
    %c0_i32_0 = arith.constant 0 : i32
    return %arg0, %c0_i32 : i32, i32
  }
  func.func @transform_3(%arg0: i32, %arg1: i32) -> (i32, i32) {
    %c0_i32 = arith.constant 0 : i32
    %c0_i32_0 = arith.constant 0 : i32
    %c0_i32_1 = arith.constant 0 : i32
    return %c0_i32, %c0_i32_0 : i32, i32
  }
  func.func @transform_4(%arg0: i32, %arg1: i32) -> (i32, i32) {
    %c0_i32 = arith.constant 0 : i32
    %c0_i32_0 = arith.constant 0 : i32
    %c0_i32_1 = arith.constant 0 : i32
    return %c0_i32, %c0_i32_0 : i32, i32
  }
  func.func @transform_5(%arg0: i32, %arg1: i32) -> (i32, i32) {
    %c0_i32 = arith.constant 0 : i32
    %c0_i32_0 = arith.constant 0 : i32
    %c0_i32_1 = arith.constant 0 : i32
    return %c0_i32, %c0_i32_0 : i32, i32
  }
  func.func @transform_6(%arg0: i32, %arg1: i32) -> (i32, i32) {
    %c0_i32 = arith.constant 0 : i32
    %c0_i32_0 = arith.constant 0 : i32
    %c0_i32_1 = arith.constant 0 : i32
    return %c0_i32, %c0_i32_0 : i32, i32
  }
  func.func @transform_7(%arg0: i32, %arg1: i32) -> (i32, i32) {
    %c0_i32 = arith.constant 0 : i32
    %c0_i32_0 = arith.constant 0 : i32
    return %arg0, %c0_i32 : i32, i32
  }
}

</mosaic_0001>

<llo_original>
// kernel: tpu_custom_call.1
$region0: #{tpu_custom_call.1}
  #allocation0 [shape = 'u32[]', space=smem, size = 0x4, offset = 0x4, fixed_abs, tag = 'smem constant byte address 0x4 - core index']
  #allocation1 [shape = 'u32[144,128]{1,0:T(1,128)}', space=vmem, size = 0x12000, scoped, tag = 'internal scratch']
  #allocation2 [shape = 'f32[128,128]{1,0:T(8,128)}', space=vmem, size = 0x10000, scoped, tag = 'scratch operand']
  %s0 = inlined_call_operand.hbm [shape: bf16[128,128], index: 0, kind: input, shape index: {}]
  %s1 = inlined_call_operand.hbm [shape: f32[128,128], index: 1, kind: input, shape index: {}]
  %s2 = inlined_call_operand.hbm [shape: f32[128,128], index: 2, kind: input, shape index: {}]
  %s3 = inlined_call_operand.hbm [shape: f32[256,128], index: 3, kind: input, shape index: {}]
  %s4 = inlined_call_operand.vmem [shape: f32[1,128], index: 4, kind: input, shape index: {}]
  %s5 = inlined_call_operand.vmem [shape: f32[1,128], index: 5, kind: input, shape index: {}]
  %s6 = inlined_call_operand.vmem [shape: f32[1,128], index: 6, kind: input, shape index: {}]
  %s7 = inlined_call_operand.hbm [shape: f32[128,128], index: 7, kind: output, shape index: {}]
  %s8 = sld [smem:[#allocation0]]
  $region62: #{tpu_custom_call.1} parent=0
    _
  %s10 = ssub.s32 1, %s8
  %s11 = scalar_select 0, %s10, %s8
  $region1: #{tpu_custom_call.1} parent=0
    #allocation3 [shape = 'u8[32768]{0}', space=vmem, size = 0x8000, scoped, tag = 'input window, operand 0, single buffered']
    #allocation4 [shape = 's32[1]{0}', space=sflag, size = 0x4, scoped, tag = 'scoped memory for tpu_custom_call.1']
    #allocation5 [shape = 's32[1]{0}', space=sflag, size = 0x4, scoped, tag = 'scoped memory for tpu_custom_call.1']
    #allocation6 [shape = 'u8[65536]{0}', space=vmem, size = 0x10000, scoped, tag = 'input window, operand 1, single buffered']
    #allocation7 [shape = 's32[1]{0}', space=sflag, size = 0x4, scoped, tag = 'scoped memory for tpu_custom_call.1']
    #allocation8 [shape = 'u8[65536]{0}', space=vmem, size = 0x10000, scoped, tag = 'input window, operand 2, single buffered']
    #allocation9 [shape = 'u8[131072]{0}', space=vmem, size = 0x20000, scoped, tag = 'input window, operand 3, single buffered']
    #allocation10 [shape = 's32[1]{0}', space=sflag, size = 0x4, scoped, tag = 'scoped memory for tpu_custom_call.1']
    #allocation11 [shape = 'u8[65536]{0}', space=vmem, size = 0x10000, scoped, tag = 'output window, operand 0, single buffered']
    %12 = vsyncpa [#allocation4], 0
    %13 = vsyncpa [#allocation7], 0
    %14 = vsyncpa [#allocation10], 0
    %15 = vsyncpa [#allocation5], 0
    // Predicated region
    $region2: #{tpu_custom_call.1} parent=1 // pred_check
      _
    $region3: #{tpu_custom_call.1} parent=1 // pred_check_branch
      %17 = sbr.rel (0) target = $region5
    $region4: #{tpu_custom_call.1} parent=1 // pred_region
      %s19 = ssub.s32 1024, 1024
      %20 = vsyncadd [#allocation4], %s19
      %s21 = sshll.u32 [#allocation3], 4
      %s22 = int_to_ptr.vmem [resolvable:$true] %s21
      %27 = dma.hbm_to_vmem [thread:$0]  %s0, 1024, %s22, [#allocation4], 64, 64, 4
    $region5: #{tpu_custom_call.1} parent=1 // pred_fallthru
      _
    // Predicated region
    $region6: #{tpu_custom_call.1} parent=1 // pred_check
      _
    $region7: #{tpu_custom_call.1} parent=1 // pred_check_branch
      %29 = sbr.rel (0) target = $region9
    $region8: #{tpu_custom_call.1} parent=1 // pred_region
      %s31 = ssub.s32 2048, 2048
      %32 = vsyncadd [#allocation7], %s31
      %s33 = sshll.u32 [#allocation6], 4
      %s34 = int_to_ptr.vmem [resolvable:$true] %s33
      %39 = dma.hbm_to_vmem [thread:$0]  %s1, 2048, %s34, [#allocation7], 128, 128, 8
    $region9: #{tpu_custom_call.1} parent=1 // pred_fallthru
      _
    // Predicated region
    $region10: #{tpu_custom_call.1} parent=1 // pred_check
      _
    $region11: #{tpu_custom_call.1} parent=1 // pred_check_branch
      %41 = sbr.rel (0) target = $region13
    $region12: #{tpu_custom_call.1} parent=1 // pred_region
      %s43 = ssub.s32 2048, 2048
      %44 = vsyncadd [#allocation7], %s43
      %s45 = sshll.u32 [#allocation8], 4
      %s46 = int_to_ptr.vmem [resolvable:$true] %s45
      %51 = dma.hbm_to_vmem [thread:$0]  %s2, 2048, %s46, [#allocation7], 128, 128, 8
    $region13: #{tpu_custom_call.1} parent=1 // pred_fallthru
      _
    // Predicated region
    $region14: #{tpu_custom_call.1} parent=1 // pred_check
      _
    $region15: #{tpu_custom_call.1} parent=1 // pred_check_branch
      %53 = sbr.rel (0) target = $region17
    $region16: #{tpu_custom_call.1} parent=1 // pred_region
      %s55 = ssub.s32 4096, 4096
      %56 = vsyncadd [#allocation10], %s55
      %s57 = sshll.u32 [#allocation9], 4
      %s58 = int_to_ptr.vmem [resolvable:$true] %s57
      %63 = dma.hbm_to_vmem [thread:$0]  %s3, 4096, %s58, [#allocation10], 128, 128, 8
    $region17: #{tpu_custom_call.1} parent=1 // pred_fallthru
      _
    // Predicated region
    $region18: #{tpu_custom_call.1} parent=1 // pred_check
      _
    $region19: #{tpu_custom_call.1} parent=1 // pred_check_branch
      %65 = sbr.rel (0) target = $region21
    $region20: #{tpu_custom_call.1} parent=1 // pred_region
      _
    $region21: #{tpu_custom_call.1} parent=1 // pred_fallthru
      _
    // Predicated region
    $region22: #{tpu_custom_call.1} parent=1 // pred_check
      _
    $region23: #{tpu_custom_call.1} parent=1 // pred_check_branch
      %67 = sbr.rel (0) target = $region25
    $region24: #{tpu_custom_call.1} parent=1 // pred_region
      _
    $region25: #{tpu_custom_call.1} parent=1 // pred_fallthru
      _
    // Predicated region
    $region26: #{tpu_custom_call.1} parent=1 // pred_check
      _
    $region27: #{tpu_custom_call.1} parent=1 // pred_check_branch
      %69 = sbr.rel (0) target = $region29
    $region28: #{tpu_custom_call.1} parent=1 // pred_region
      _
    $region29: #{tpu_custom_call.1} parent=1 // pred_fallthru
      _
    // Predicated region
    $region30: #{tpu_custom_call.1} parent=1 // pred_check
      _
    $region31: #{tpu_custom_call.1} parent=1 // pred_check_branch
      %71 = sbr.rel (0) target = $region33
    $region32: #{tpu_custom_call.1} parent=1 // pred_region
      %72 = dma.done [#allocation4], 1024
    $region33: #{tpu_custom_call.1} parent=1 // pred_fallthru
      _
    // Predicated region
    $region34: #{tpu_custom_call.1} parent=1 // pred_check
      _
    $region35: #{tpu_custom_call.1} parent=1 // pred_check_branch
      %74 = sbr.rel (0) target = $region37
    $region36: #{tpu_custom_call.1} parent=1 // pred_region
      %75 = dma.done [#allocation7], 2048
    $region37: #{tpu_custom_call.1} parent=1 // pred_fallthru
      _
    // Predicated region
    $region38: #{tpu_custom_call.1} parent=1 // pred_check
      _
    $region39: #{tpu_custom_call.1} parent=1 // pred_check_branch
      %77 = sbr.rel (0) target = $region41
    $region40: #{tpu_custom_call.1} parent=1 // pred_region
      %78 = dma.done [#allocation7], 2048
    $region41: #{tpu_custom_call.1} parent=1 // pred_fallthru
      _
    // Predicated region
    $region42: #{tpu_custom_call.1} parent=1 // pred_check
      _
    $region43: #{tpu_custom_call.1} parent=1 // pred_check_branch
      %80 = sbr.rel (0) target = $region45
    $region44: #{tpu_custom_call.1} parent=1 // pred_region
      %81 = dma.done [#allocation10], 4096
    $region45: #{tpu_custom_call.1} parent=1 // pred_fallthru
      _
    %p82 = scmp.eq.s32.totalorder 0, 0
    // Predicated region
    $region46: #{tpu_custom_call.1} parent=1 // pred_check
      %p83 = pneg %p82
    $region47: #{tpu_custom_call.1} parent=1 // pred_check_branch
      %85 = sbr.rel (%p83) target = $region49
    $region48: #{tpu_custom_call.1} parent=1 // pred_region
      %86 = vst [vmem:[#allocation2] sm:$0xff] 0.0
      %87 = vst [vmem:[#allocation2 + $0x8] sm:$0xff] 0.0
      %88 = vst [vmem:[#allocation2 + $0x10] sm:$0xff] 0.0
      %89 = vst [vmem:[#allocation2 + $0x18] sm:$0xff] 0.0
      %90 = vst [vmem:[#allocation2 + $0x20] sm:$0xff] 0.0
      %91 = vst [vmem:[#allocation2 + $0x28] sm:$0xff] 0.0
      %92 = vst [vmem:[#allocation2 + $0x30] sm:$0xff] 0.0
      %93 = vst [vmem:[#allocation2 + $0x38] sm:$0xff] 0.0
      %94 = vst [vmem:[#allocation2 + $0x40] sm:$0xff] 0.0
      %95 = vst [vmem:[#allocation2 + $0x48] sm:$0xff] 0.0
      %96 = vst [vmem:[#allocation2 + $0x50] sm:$0xff] 0.0
      %97 = vst [vmem:[#allocation2 + $0x58] sm:$0xff] 0.0
      %98 = vst [vmem:[#allocation2 + $0x60] sm:$0xff] 0.0
      %99 = vst [vmem:[#allocation2 + $0x68] sm:$0xff] 0.0
      %100 = vst [vmem:[#allocation2 + $0x70] sm:$0xff] 0.0
      %101 = vst [vmem:[#allocation2 + $0x78] sm:$0xff] 0.0
    $region49: #{tpu_custom_call.1} parent=1 // pred_fallthru
      _
    %v102 = vld [vmem:[#allocation2] sm:$0xff]
    %v103 = vld [vmem:[#allocation2 + $0x8] sm:$0xff]
    %v104 = vld [vmem:[#allocation2 + $0x10] sm:$0xff]
    %v105 = vld [vmem:[#allocation2 + $0x18] sm:$0xff]
    %v106 = vld [vmem:[#allocation2 + $0x20] sm:$0xff]
    %v107 = vld [vmem:[#allocation2 + $0x28] sm:$0xff]
    %v108 = vld [vmem:[#allocation2 + $0x30] sm:$0xff]
    %v109 = vld [vmem:[#allocation2 + $0x38] sm:$0xff]
    %v110 = vld [vmem:[#allocation2 + $0x40] sm:$0xff]
    %v111 = vld [vmem:[#allocation2 + $0x48] sm:$0xff]
    %v112 = vld [vmem:[#allocation2 + $0x50] sm:$0xff]
    %v113 = vld [vmem:[#allocation2 + $0x58] sm:$0xff]
    %v114 = vld [vmem:[#allocation2 + $0x60] sm:$0xff]
    %v115 = vld [vmem:[#allocation2 + $0x68] sm:$0xff]
    %v116 = vld [vmem:[#allocation2 + $0x70] sm:$0xff]
    %v117 = vld [vmem:[#allocation2 + $0x78] sm:$0xff]
    %v118 = vld [vmem:[#allocation3] sm:$0xf]
    %v119 = vld [vmem:[#allocation3 + $0x4] sm:$0xf]
    %v120 = vld [vmem:[#allocation3 + $0x8] sm:$0xf]
    %v121 = vld [vmem:[#allocation3 + $0xc] sm:$0xf]
    %v122 = vld [vmem:[#allocation3 + $0x10] sm:$0xf]
    %v123 = vld [vmem:[#allocation3 + $0x14] sm:$0xf]
    %v124 = vld [vmem:[#allocation3 + $0x18] sm:$0xf]
    %v125 = vld [vmem:[#allocation3 + $0x1c] sm:$0xf]
    %v126 = vld [vmem:[#allocation3 + $0x20] sm:$0xf]
    %v127 = vld [vmem:[#allocation3 + $0x24] sm:$0xf]
    %v128 = vld [vmem:[#allocation3 + $0x28] sm:$0xf]
    %v129 = vld [vmem:[#allocation3 + $0x2c] sm:$0xf]
    %v130 = vld [vmem:[#allocation3 + $0x30] sm:$0xf]
    %v131 = vld [vmem:[#allocation3 + $0x34] sm:$0xf]
    %v132 = vld [vmem:[#allocation3 + $0x38] sm:$0xf]
    %v133 = vld [vmem:[#allocation3 + $0x3c] sm:$0xf]
    %v134 = vunpack.c.l.bf16 %v118
    %v135 = vunpack.c.l.bf16 %v119
    %v136 = vunpack.c.l.bf16 %v120
    %v137 = vunpack.c.l.bf16 %v121
    %v138 = vunpack.c.l.bf16 %v122
    %v139 = vunpack.c.l.bf16 %v123
    %v140 = vunpack.c.l.bf16 %v124
    %v141 = vunpack.c.l.bf16 %v125
    %v142 = vunpack.c.l.bf16 %v126
    %v143 = vunpack.c.l.bf16 %v127
    %v144 = vunpack.c.l.bf16 %v128
    %v145 = vunpack.c.l.bf16 %v129
    %v146 = vunpack.c.l.bf16 %v130
    %v147 = vunpack.c.l.bf16 %v131
    %v148 = vunpack.c.l.bf16 %v132
    %v149 = vunpack.c.l.bf16 %v133
    %v150 = vld [vmem:[#allocation6] sm:$0xff]
    %v151 = vld [vmem:[#allocation6 + $0x8] sm:$0xff]
    %v152 = vld [vmem:[#allocation6 + $0x10] sm:$0xff]
    %v153 = vld [vmem:[#allocation6 + $0x18] sm:$0xff]
    %v154 = vld [vmem:[#allocation6 + $0x20] sm:$0xff]
    %v155 = vld [vmem:[#allocation6 + $0x28] sm:$0xff]
    %v156 = vld [vmem:[#allocation6 + $0x30] sm:$0xff]
    %v157 = vld [vmem:[#allocation6 + $0x38] sm:$0xff]
    %v158 = vld [vmem:[#allocation6 + $0x40] sm:$0xff]
    %v159 = vld [vmem:[#allocation6 + $0x48] sm:$0xff]
    %v160 = vld [vmem:[#allocation6 + $0x50] sm:$0xff]
    %v161 = vld [vmem:[#allocation6 + $0x58] sm:$0xff]
    %v162 = vld [vmem:[#allocation6 + $0x60] sm:$0xff]
    %v163 = vld [vmem:[#allocation6 + $0x68] sm:$0xff]
    %v164 = vld [vmem:[#allocation6 + $0x70] sm:$0xff]
    %v165 = vld [vmem:[#allocation6 + $0x78] sm:$0xff]
    %166 = vmatprep.subr.mxu0 0.0
    %167 = vmatpush1.msra.mxu0 %v165
    %168 = vmatprep.subr.mxu0 0.0
    %169 = vmatpush1.msra.mxu0 %v164
    %170 = vmatprep.subr.mxu0 0.0
    %171 = vmatpush1.msra.mxu0 %v163
    %172 = vmatprep.subr.mxu0 0.0
    %173 = vmatpush1.msra.mxu0 %v162
    %174 = vmatprep.subr.mxu0 0.0
    %175 = vmatpush1.msra.mxu0 %v161
    %176 = vmatprep.subr.mxu0 0.0
    %177 = vmatpush1.msra.mxu0 %v160
    %178 = vmatprep.subr.mxu0 0.0
    %179 = vmatpush1.msra.mxu0 %v159
    %180 = vmatprep.subr.mxu0 0.0
    %181 = vmatpush1.msra.mxu0 %v158
    %182 = vmatprep.subr.mxu0 0.0
    %183 = vmatpush1.msra.mxu0 %v157
    %184 = vmatprep.subr.mxu0 0.0
    %185 = vmatpush1.msra.mxu0 %v156
    %186 = vmatprep.subr.mxu0 0.0
    %187 = vmatpush1.msra.mxu0 %v155
    %188 = vmatprep.subr.mxu0 0.0
    %189 = vmatpush1.msra.mxu0 %v154
    %190 = vmatprep.subr.mxu0 0.0
    %191 = vmatpush1.msra.mxu0 %v153
    %192 = vmatprep.subr.mxu0 0.0
    %193 = vmatpush1.msra.mxu0 %v152
    %194 = vmatprep.subr.mxu0 0.0
    %195 = vmatpush1.msra.mxu0 %v151
    %196 = vmatprep.subr.mxu0 0.0
    %197 = vmatpush1.msra.mxu0 %v150
    %198 = vmatprep.subr.mxu0 0.0
    %199 = vmatpush2.msra.mxu0 0.0
    %200 = vmatprep.subr.mxu0 0.0
    %201 = vmatpush2.msra.mxu0 0.0
    %202 = vmatprep.subr.mxu0 0.0
    %203 = vmatpush2.msra.mxu0 0.0
    %204 = vmatprep.subr.mxu0 0.0
    %205 = vmatpush2.msra.mxu0 0.0
    %206 = vmatprep.subr.mxu0 0.0
    %207 = vmatpush2.msra.mxu0 0.0
    %208 = vmatprep.subr.mxu0 0.0
    %209 = vmatpush2.msra.mxu0 0.0
    %210 = vmatprep.subr.mxu0 0.0
    %211 = vmatpush2.msra.mxu0 0.0
    %212 = vmatprep.subr.mxu0 0.0
    %213 = vmatpush2.msra.mxu0 0.0
    %214 = vmatprep.subr.mxu0 0.0
    %215 = vmatpush2.msra.mxu0 0.0
    %216 = vmatprep.subr.mxu0 0.0
    %217 = vmatpush2.msra.mxu0 0.0
    %218 = vmatprep.subr.mxu0 0.0
    %219 = vmatpush2.msra.mxu0 0.0
    %220 = vmatprep.subr.mxu0 0.0
    %221 = vmatpush2.msra.mxu0 0.0
    %222 = vmatprep.subr.mxu0 0.0
    %223 = vmatpush2.msra.mxu0 0.0
    %224 = vmatprep.subr.mxu0 0.0
    %225 = vmatpush2.msra.mxu0 0.0
    %226 = vmatprep.subr.mxu0 0.0
    %227 = vmatpush2.msra.mxu0 0.0
    %228 = vmatprep.subr.mxu0 0.0
    %229 = vmatpush2.msra.mxu0 0.0
    %230 = vmatprep.mubr.f32.mxu0 0.0
    %231 = vmatmul.mubr.f32.gmra.mxu0 %v134
    %v232 = vpop.f32.mrf.mxu0
    %v233 = vadd.f32 0.0, %v232
    %v234 = vpop.f32.mrf.mxu0
    %235 = vmatprep.mubr.f32.mxu0 0.0
    %236 = vmatmul.mubr.f32.gmra.mxu0 %v135
    %v237 = vpop.f32.mrf.mxu0
    %v238 = vadd.f32 0.0, %v237
    %v239 = vpop.f32.mrf.mxu0
    %240 = vmatprep.mubr.f32.mxu0 0.0
    %241 = vmatmul.mubr.f32.gmra.mxu0 %v136
    %v242 = vpop.f32.mrf.mxu0
    %v243 = vadd.f32 0.0, %v242
    %v244 = vpop.f32.mrf.mxu0
    %245 = vmatprep.mubr.f32.mxu0 0.0
    %246 = vmatmul.mubr.f32.gmra.mxu0 %v137
    %v247 = vpop.f32.mrf.mxu0
    %v248 = vadd.f32 0.0, %v247
    %v249 = vpop.f32.mrf.mxu0
    %250 = vmatprep.mubr.f32.mxu0 0.0
    %251 = vmatmul.mubr.f32.gmra.mxu0 %v138
    %v252 = vpop.f32.mrf.mxu0
    %v253 = vadd.f32 0.0, %v252
    %v254 = vpop.f32.mrf.mxu0
    %255 = vmatprep.mubr.f32.mxu0 0.0
    %256 = vmatmul.mubr.f32.gmra.mxu0 %v139
    %v257 = vpop.f32.mrf.mxu0
    %v258 = vadd.f32 0.0, %v257
    %v259 = vpop.f32.mrf.mxu0
    %260 = vmatprep.mubr.f32.mxu0 0.0
    %261 = vmatmul.mubr.f32.gmra.mxu0 %v140
    %v262 = vpop.f32.mrf.mxu0
    %v263 = vadd.f32 0.0, %v262
    %v264 = vpop.f32.mrf.mxu0
    %265 = vmatprep.mubr.f32.mxu0 0.0
    %266 = vmatmul.mubr.f32.gmra.mxu0 %v141
    %v267 = vpop.f32.mrf.mxu0
    %v268 = vadd.f32 0.0, %v267
    %v269 = vpop.f32.mrf.mxu0
    %270 = vmatprep.mubr.f32.mxu0 0.0
    %271 = vmatmul.mubr.f32.gmra.mxu0 %v142
    %v272 = vpop.f32.mrf.mxu0
    %v273 = vadd.f32 0.0, %v272
    %v274 = vpop.f32.mrf.mxu0
    %275 = vmatprep.mubr.f32.mxu0 0.0
    %276 = vmatmul.mubr.f32.gmra.mxu0 %v143
    %v277 = vpop.f32.mrf.mxu0
    %v278 = vadd.f32 0.0, %v277
    %v279 = vpop.f32.mrf.mxu0
    %280 = vmatprep.mubr.f32.mxu0 0.0
    %281 = vmatmul.mubr.f32.gmra.mxu0 %v144
    %v282 = vpop.f32.mrf.mxu0
    %v283 = vadd.f32 0.0, %v282
    %v284 = vpop.f32.mrf.mxu0
    %285 = vmatprep.mubr.f32.mxu0 0.0
    %286 = vmatmul.mubr.f32.gmra.mxu0 %v145
    %v287 = vpop.f32.mrf.mxu0
    %v288 = vadd.f32 0.0, %v287
    %v289 = vpop.f32.mrf.mxu0
    %290 = vmatprep.mubr.f32.mxu0 0.0
    %291 = vmatmul.mubr.f32.gmra.mxu0 %v146
    %v292 = vpop.f32.mrf.mxu0
    %v293 = vadd.f32 0.0, %v292
    %v294 = vpop.f32.mrf.mxu0
    %295 = vmatprep.mubr.f32.mxu0 0.0
    %296 = vmatmul.mubr.f32.gmra.mxu0 %v147
    %v297 = vpop.f32.mrf.mxu0
    %v298 = vadd.f32 0.0, %v297
    %v299 = vpop.f32.mrf.mxu0
    %300 = vmatprep.mubr.f32.mxu0 0.0
    %301 = vmatmul.mubr.f32.gmra.mxu0 %v148
    %v302 = vpop.f32.mrf.mxu0
    %v303 = vadd.f32 0.0, %v302
    %v304 = vpop.f32.mrf.mxu0
    %305 = vmatprep.mubr.f32.mxu0 0.0
    %306 = vmatmul.mubr.f32.gmra.mxu0 %v149
    %v307 = vpop.f32.mrf.mxu0
    %v308 = vadd.f32 0.0, %v307
    %v309 = vpop.f32.mrf.mxu0
    %310 = vdwg.mxu0
    %v311 = vadd.f32 %v102, %v233
    %v312 = vadd.f32 %v103, %v238
    %v313 = vadd.f32 %v104, %v243
    %v314 = vadd.f32 %v105, %v248
    %v315 = vadd.f32 %v106, %v253
    %v316 = vadd.f32 %v107, %v258
    %v317 = vadd.f32 %v108, %v263
    %v318 = vadd.f32 %v109, %v268
    %v319 = vadd.f32 %v110, %v273
    %v320 = vadd.f32 %v111, %v278
    %v321 = vadd.f32 %v112, %v283
    %v322 = vadd.f32 %v113, %v288
    %v323 = vadd.f32 %v114, %v293
    %v324 = vadd.f32 %v115, %v298
    %v325 = vadd.f32 %v116, %v303
    %v326 = vadd.f32 %v117, %v308
    %327 = vst [vmem:[#allocation2] sm:$0xff] %v311
    %328 = vst [vmem:[#allocation2 + $0x8] sm:$0xff] %v312
    %329 = vst [vmem:[#allocation2 + $0x10] sm:$0xff] %v313
    %330 = vst [vmem:[#allocation2 + $0x18] sm:$0xff] %v314
    %331 = vst [vmem:[#allocation2 + $0x20] sm:$0xff] %v315
    %332 = vst [vmem:[#allocation2 + $0x28] sm:$0xff] %v316
    %333 = vst [vmem:[#allocation2 + $0x30] sm:$0xff] %v317
    %334 = vst [vmem:[#allocation2 + $0x38] sm:$0xff] %v318
    %335 = vst [vmem:[#allocation2 + $0x40] sm:$0xff] %v319
    %336 = vst [vmem:[#allocation2 + $0x48] sm:$0xff] %v320
    %337 = vst [vmem:[#allocation2 + $0x50] sm:$0xff] %v321
    %338 = vst [vmem:[#allocation2 + $0x58] sm:$0xff] %v322
    %339 = vst [vmem:[#allocation2 + $0x60] sm:$0xff] %v323
    %340 = vst [vmem:[#allocation2 + $0x68] sm:$0xff] %v324
    %341 = vst [vmem:[#allocation2 + $0x70] sm:$0xff] %v325
    %342 = vst [vmem:[#allocation2 + $0x78] sm:$0xff] %v326
    // Predicated region
    $region50: #{tpu_custom_call.1} parent=1 // pred_check
      %p343 = pneg %p82
    $region51: #{tpu_custom_call.1} parent=1 // pred_check_branch
      %345 = sbr.rel (%p343) target = $region53
    $region52: #{tpu_custom_call.1} parent=1 // pred_region
      %v346 = vld [vmem:[#allocation2] sm:$0xff]
      %v347 = vld [vmem:[#allocation2 + $0x8] sm:$0xff]
      %v348 = vld [vmem:[#allocation2 + $0x10] sm:$0xff]
      %v349 = vld [vmem:[#allocation2 + $0x18] sm:$0xff]
      %v350 = vld [vmem:[#allocation2 + $0x20] sm:$0xff]
      %v351 = vld [vmem:[#allocation2 + $0x28] sm:$0xff]
      %v352 = vld [vmem:[#allocation2 + $0x30] sm:$0xff]
      %v353 = vld [vmem:[#allocation2 + $0x38] sm:$0xff]
      %v354 = vld [vmem:[#allocation2 + $0x40] sm:$0xff]
      %v355 = vld [vmem:[#allocation2 + $0x48] sm:$0xff]
      %v356 = vld [vmem:[#allocation2 + $0x50] sm:$0xff]
      %v357 = vld [vmem:[#allocation2 + $0x58] sm:$0xff]
      %v358 = vld [vmem:[#allocation2 + $0x60] sm:$0xff]
      %v359 = vld [vmem:[#allocation2 + $0x68] sm:$0xff]
      %v360 = vld [vmem:[#allocation2 + $0x70] sm:$0xff]
      %v361 = vld [vmem:[#allocation2 + $0x78] sm:$0xff]
      %v362 = vld [vmem:[#allocation8] sm:$0xff]
      %v363 = vld [vmem:[#allocation8 + $0x8] sm:$0xff]
      %v364 = vld [vmem:[#allocation8 + $0x10] sm:$0xff]
      %v365 = vld [vmem:[#allocation8 + $0x18] sm:$0xff]
      %v366 = vld [vmem:[#allocation8 + $0x20] sm:$0xff]
      %v367 = vld [vmem:[#allocation8 + $0x28] sm:$0xff]
      %v368 = vld [vmem:[#allocation8 + $0x30] sm:$0xff]
      %v369 = vld [vmem:[#allocation8 + $0x38] sm:$0xff]
      %v370 = vld [vmem:[#allocation8 + $0x40] sm:$0xff]
      %v371 = vld [vmem:[#allocation8 + $0x48] sm:$0xff]
      %v372 = vld [vmem:[#allocation8 + $0x50] sm:$0xff]
      %v373 = vld [vmem:[#allocation8 + $0x58] sm:$0xff]
      %v374 = vld [vmem:[#allocation8 + $0x60] sm:$0xff]
      %v375 = vld [vmem:[#allocation8 + $0x68] sm:$0xff]
      %v376 = vld [vmem:[#allocation8 + $0x70] sm:$0xff]
      %v377 = vld [vmem:[#allocation8 + $0x78] sm:$0xff]
      %v378 = vld [vmem:[#allocation9] sm:$0xff]
      %v379 = vld [vmem:[#allocation9 + $0x8] sm:$0xff]
      %v380 = vld [vmem:[#allocation9 + $0x10] sm:$0xff]
      %v381 = vld [vmem:[#allocation9 + $0x18] sm:$0xff]
      %v382 = vld [vmem:[#allocation9 + $0x20] sm:$0xff]
      %v383 = vld [vmem:[#allocation9 + $0x28] sm:$0xff]
      %v384 = vld [vmem:[#allocation9 + $0x30] sm:$0xff]
      %v385 = vld [vmem:[#allocation9 + $0x38] sm:$0xff]
      %v386 = vld [vmem:[#allocation9 + $0x40] sm:$0xff]
      %v387 = vld [vmem:[#allocation9 + $0x48] sm:$0xff]
      %v388 = vld [vmem:[#allocation9 + $0x50] sm:$0xff]
      %v389 = vld [vmem:[#allocation9 + $0x58] sm:$0xff]
      %v390 = vld [vmem:[#allocation9 + $0x60] sm:$0xff]
      %v391 = vld [vmem:[#allocation9 + $0x68] sm:$0xff]
      %v392 = vld [vmem:[#allocation9 + $0x70] sm:$0xff]
      %v393 = vld [vmem:[#allocation9 + $0x78] sm:$0xff]
      %v394 = vld [vmem:[#allocation9 + $0x80] sm:$0xff]
      %v395 = vld [vmem:[#allocation9 + $0x88] sm:$0xff]
      %v396 = vld [vmem:[#allocation9 + $0x90] sm:$0xff]
      %v397 = vld [vmem:[#allocation9 + $0x98] sm:$0xff]
      %v398 = vld [vmem:[#allocation9 + $0xa0] sm:$0xff]
      %v399 = vld [vmem:[#allocation9 + $0xa8] sm:$0xff]
      %v400 = vld [vmem:[#allocation9 + $0xb0] sm:$0xff]
      %v401 = vld [vmem:[#allocation9 + $0xb8] sm:$0xff]
      %v402 = vld [vmem:[#allocation9 + $0xc0] sm:$0xff]
      %v403 = vld [vmem:[#allocation9 + $0xc8] sm:$0xff]
      %v404 = vld [vmem:[#allocation9 + $0xd0] sm:$0xff]
      %v405 = vld [vmem:[#allocation9 + $0xd8] sm:$0xff]
      %v406 = vld [vmem:[#allocation9 + $0xe0] sm:$0xff]
      %v407 = vld [vmem:[#allocation9 + $0xe8] sm:$0xff]
      %v408 = vld [vmem:[#allocation9 + $0xf0] sm:$0xff]
      %v409 = vld [vmem:[#allocation9 + $0xf8] sm:$0xff]
      %v410 = vld [vmem:[%s4] sm:$0x1]
      %v412 = vlaneseq
      %v413 = vshrl.u32 %v412, 7
      %v414 = vsub.s32 0, %v413
      %v415 = vrot.slane %v410, %v414
      %417 = vmatprep.subr.mxu0 0.0
      %418 = vmatpush1.msra.mxu0 %v393
      %419 = vmatprep.subr.mxu0 0.0
      %420 = vmatpush1.msra.mxu0 %v392
      %421 = vmatprep.subr.mxu0 0.0
      %422 = vmatpush1.msra.mxu0 %v391
      %423 = vmatprep.subr.mxu0 0.0
      %424 = vmatpush1.msra.mxu0 %v390
      %425 = vmatprep.subr.mxu0 0.0
      %426 = vmatpush1.msra.mxu0 %v389
      %427 = vmatprep.subr.mxu0 0.0
      %428 = vmatpush1.msra.mxu0 %v388
      %429 = vmatprep.subr.mxu0 0.0
      %430 = vmatpush1.msra.mxu0 %v387
      %431 = vmatprep.subr.mxu0 0.0
      %432 = vmatpush1.msra.mxu0 %v386
      %433 = vmatprep.subr.mxu0 0.0
      %434 = vmatpush1.msra.mxu0 %v385
      %435 = vmatprep.subr.mxu0 0.0
      %436 = vmatpush1.msra.mxu0 %v384
      %437 = vmatprep.subr.mxu0 0.0
      %438 = vmatpush1.msra.mxu0 %v383
      %439 = vmatprep.subr.mxu0 0.0
      %440 = vmatpush1.msra.mxu0 %v382
      %441 = vmatprep.subr.mxu0 0.0
      %442 = vmatpush1.msra.mxu0 %v381
      %443 = vmatprep.subr.mxu0 0.0
      %444 = vmatpush1.msra.mxu0 %v380
      %445 = vmatprep.subr.mxu0 0.0
      %446 = vmatpush1.msra.mxu0 %v379
      %447 = vmatprep.subr.mxu0 0.0
      %448 = vmatpush1.msra.mxu0 %v378
      %449 = vmatprep.subr.mxu0 0.0
      %450 = vmatpush2.msra.mxu0 %v409
      %451 = vmatprep.subr.mxu0 0.0
      %452 = vmatpush2.msra.mxu0 %v408
      %453 = vmatprep.subr.mxu0 0.0
      %454 = vmatpush2.msra.mxu0 %v407
      %455 = vmatprep.subr.mxu0 0.0
      %456 = vmatpush2.msra.mxu0 %v406
      %457 = vmatprep.subr.mxu0 0.0
      %458 = vmatpush2.msra.mxu0 %v405
      %459 = vmatprep.subr.mxu0 0.0
      %460 = vmatpush2.msra.mxu0 %v404
      %461 = vmatprep.subr.mxu0 0.0
      %462 = vmatpush2.msra.mxu0 %v403
      %463 = vmatprep.subr.mxu0 0.0
      %464 = vmatpush2.msra.mxu0 %v402
      %465 = vmatprep.subr.mxu0 0.0
      %466 = vmatpush2.msra.mxu0 %v401
      %467 = vmatprep.subr.mxu0 0.0
      %468 = vmatpush2.msra.mxu0 %v400
      %469 = vmatprep.subr.mxu0 0.0
      %470 = vmatpush2.msra.mxu0 %v399
      %471 = vmatprep.subr.mxu0 0.0
      %472 = vmatpush2.msra.mxu0 %v398
      %473 = vmatprep.subr.mxu0 0.0
      %474 = vmatpush2.msra.mxu0 %v397
      %475 = vmatprep.subr.mxu0 0.0
      %476 = vmatpush2.msra.mxu0 %v396
      %477 = vmatprep.subr.mxu0 0.0
      %478 = vmatpush2.msra.mxu0 %v395
      %479 = vmatprep.subr.mxu0 0.0
      %480 = vmatpush2.msra.mxu0 %v394
      %481 = vmatprep.mubr.f32.mxu0 %v346
      %482 = vmatmul.mubr.f32.gmra.mxu0 %v362
      %v483 = vpop.f32.mrf.mxu0
      %v484 = vadd.f32 %v415, %v483
      %v485 = vpop.f32.mrf.mxu0
      %486 = vmatprep.mubr.f32.mxu0 %v347
      %487 = vmatmul.mubr.f32.gmra.mxu0 %v363
      %v488 = vpop.f32.mrf.mxu0
      %v489 = vadd.f32 %v415, %v488
      %v490 = vpop.f32.mrf.mxu0
      %491 = vmatprep.mubr.f32.mxu0 %v348
      %492 = vmatmul.mubr.f32.gmra.mxu0 %v364
      %v493 = vpop.f32.mrf.mxu0
      %v494 = vadd.f32 %v415, %v493
      %v495 = vpop.f32.mrf.mxu0
      %496 = vmatprep.mubr.f32.mxu0 %v349
      %497 = vmatmul.mubr.f32.gmra.mxu0 %v365
      %v498 = vpop.f32.mrf.mxu0
      %v499 = vadd.f32 %v415, %v498
      %v500 = vpop.f32.mrf.mxu0
      %501 = vmatprep.mubr.f32.mxu0 %v350
      %502 = vmatmul.mubr.f32.gmra.mxu0 %v366
      %v503 = vpop.f32.mrf.mxu0
      %v504 = vadd.f32 %v415, %v503
      %v505 = vpop.f32.mrf.mxu0
      %506 = vmatprep.mubr.f32.mxu0 %v351
      %507 = vmatmul.mubr.f32.gmra.mxu0 %v367
      %v508 = vpop.f32.mrf.mxu0
      %v509 = vadd.f32 %v415, %v508
      %v510 = vpop.f32.mrf.mxu0
      %511 = vmatprep.mubr.f32.mxu0 %v352
      %512 = vmatmul.mubr.f32.gmra.mxu0 %v368
      %v513 = vpop.f32.mrf.mxu0
      %v514 = vadd.f32 %v415, %v513
      %v515 = vpop.f32.mrf.mxu0
      %516 = vmatprep.mubr.f32.mxu0 %v353
      %517 = vmatmul.mubr.f32.gmra.mxu0 %v369
      %v518 = vpop.f32.mrf.mxu0
      %v519 = vadd.f32 %v415, %v518
      %v520 = vpop.f32.mrf.mxu0
      %521 = vmatprep.mubr.f32.mxu0 %v354
      %522 = vmatmul.mubr.f32.gmra.mxu0 %v370
      %v523 = vpop.f32.mrf.mxu0
      %v524 = vadd.f32 %v415, %v523
      %v525 = vpop.f32.mrf.mxu0
      %526 = vmatprep.mubr.f32.mxu0 %v355
      %527 = vmatmul.mubr.f32.gmra.mxu0 %v371
      %v528 = vpop.f32.mrf.mxu0
      %v529 = vadd.f32 %v415, %v528
      %v530 = vpop.f32.mrf.mxu0
      %531 = vmatprep.mubr.f32.mxu0 %v356
      %532 = vmatmul.mubr.f32.gmra.mxu0 %v372
      %v533 = vpop.f32.mrf.mxu0
      %v534 = vadd.f32 %v415, %v533
      %v535 = vpop.f32.mrf.mxu0
      %536 = vmatprep.mubr.f32.mxu0 %v357
      %537 = vmatmul.mubr.f32.gmra.mxu0 %v373
      %v538 = vpop.f32.mrf.mxu0
      %v539 = vadd.f32 %v415, %v538
      %v540 = vpop.f32.mrf.mxu0
      %541 = vmatprep.mubr.f32.mxu0 %v358
      %542 = vmatmul.mubr.f32.gmra.mxu0 %v374
      %v543 = vpop.f32.mrf.mxu0
      %v544 = vadd.f32 %v415, %v543
      %v545 = vpop.f32.mrf.mxu0
      %546 = vmatprep.mubr.f32.mxu0 %v359
      %547 = vmatmul.mubr.f32.gmra.mxu0 %v375
      %v548 = vpop.f32.mrf.mxu0
      %v549 = vadd.f32 %v415, %v548
      %v550 = vpop.f32.mrf.mxu0
      %551 = vmatprep.mubr.f32.mxu0 %v360
      %552 = vmatmul.mubr.f32.gmra.mxu0 %v376
      %v553 = vpop.f32.mrf.mxu0
      %v554 = vadd.f32 %v415, %v553
      %v555 = vpop.f32.mrf.mxu0
      %556 = vmatprep.mubr.f32.mxu0 %v361
      %557 = vmatmul.mubr.f32.gmra.mxu0 %v377
      %v558 = vpop.f32.mrf.mxu0
      %v559 = vadd.f32 %v415, %v558
      %v560 = vpop.f32.mrf.mxu0
      %561 = vdwg.mxu0
      %v562 = vlaneseq
      %v563 = vand.u32 %v562, 127
      %vm564 = vcmp.lt.s32.totalorder %v563, 32
      %v565 = vsel %vm564, %v484, 0.0
      %v566 = vsel %vm564, %v489, 0.0
      %v567 = vsel %vm564, %v494, 0.0
      %v568 = vsel %vm564, %v499, 0.0
      %v569 = vsel %vm564, %v504, 0.0
      %v570 = vsel %vm564, %v509, 0.0
      %v571 = vsel %vm564, %v514, 0.0
      %v572 = vsel %vm564, %v519, 0.0
      %v573 = vsel %vm564, %v524, 0.0
      %v574 = vsel %vm564, %v529, 0.0
      %v575 = vsel %vm564, %v534, 0.0
      %v576 = vsel %vm564, %v539, 0.0
      %v577 = vsel %vm564, %v544, 0.0
      %v578 = vsel %vm564, %v549, 0.0
      %v579 = vsel %vm564, %v554, 0.0
      %v580 = vsel %vm564, %v559, 0.0
      %581 = vadd.xlane.f32.xlu0 %v565
      %v582 = vpop.xlane.xlu0 %581
      %583 = vadd.xlane.f32.xlu0 %v566
      %v584 = vpop.xlane.xlu0 %583
      %585 = vadd.xlane.f32.xlu0 %v567
      %v586 = vpop.xlane.xlu0 %585
      %587 = vadd.xlane.f32.xlu0 %v568
      %v588 = vpop.xlane.xlu0 %587
      %589 = vadd.xlane.f32.xlu0 %v569
      %v590 = vpop.xlane.xlu0 %589
      %591 = vadd.xlane.f32.xlu0 %v570
      %v592 = vpop.xlane.xlu0 %591
      %593 = vadd.xlane.f32.xlu0 %v571
      %v594 = vpop.xlane.xlu0 %593
      %595 = vadd.xlane.f32.xlu0 %v572
      %v596 = vpop.xlane.xlu0 %595
      %597 = vadd.xlane.f32.xlu0 %v573
      %v598 = vpop.xlane.xlu0 %597
      %599 = vadd.xlane.f32.xlu0 %v574
      %v600 = vpop.xlane.xlu0 %599
      %601 = vadd.xlane.f32.xlu0 %v575
      %v602 = vpop.xlane.xlu0 %601
      %603 = vadd.xlane.f32.xlu0 %v576
      %v604 = vpop.xlane.xlu0 %603
      %605 = vadd.xlane.f32.xlu0 %v577
      %v606 = vpop.xlane.xlu0 %605
      %607 = vadd.xlane.f32.xlu0 %v578
      %v608 = vpop.xlane.xlu0 %607
      %609 = vadd.xlane.f32.xlu0 %v579
      %v610 = vpop.xlane.xlu0 %609
      %611 = vadd.xlane.f32.xlu0 %v580
      %v612 = vpop.xlane.xlu0 %611
      %v613 = vmul.f32 %v582, 0.03125
      %v614 = vmul.f32 %v584, 0.03125
      %v615 = vmul.f32 %v586, 0.03125
      %v616 = vmul.f32 %v588, 0.03125
      %v617 = vmul.f32 %v590, 0.03125
      %v618 = vmul.f32 %v592, 0.03125
      %v619 = vmul.f32 %v594, 0.03125
      %v620 = vmul.f32 %v596, 0.03125
      %v621 = vmul.f32 %v598, 0.03125
      %v622 = vmul.f32 %v600, 0.03125
      %v623 = vmul.f32 %v602, 0.03125
      %v624 = vmul.f32 %v604, 0.03125
      %v625 = vmul.f32 %v606, 0.03125
      %v626 = vmul.f32 %v608, 0.03125
      %v627 = vmul.f32 %v610, 0.03125
      %v628 = vmul.f32 %v612, 0.03125
      %v629 = vsub.f32 %v484, %v613
      %v630 = vsub.f32 %v489, %v614
      %v631 = vsub.f32 %v494, %v615
      %v632 = vsub.f32 %v499, %v616
      %v633 = vsub.f32 %v504, %v617
      %v634 = vsub.f32 %v509, %v618
      %v635 = vsub.f32 %v514, %v619
      %v636 = vsub.f32 %v519, %v620
      %v637 = vsub.f32 %v524, %v621
      %v638 = vsub.f32 %v529, %v622
      %v639 = vsub.f32 %v534, %v623
      %v640 = vsub.f32 %v539, %v624
      %v641 = vsub.f32 %v544, %v625
      %v642 = vsub.f32 %v549, %v626
      %v643 = vsub.f32 %v554, %v627
      %v644 = vsub.f32 %v559, %v628
      %v645 = vsel %vm564, %v629, 0.0
      %v646 = vsel %vm564, %v630, 0.0
      %v647 = vsel %vm564, %v631, 0.0
      %v648 = vsel %vm564, %v632, 0.0
      %v649 = vsel %vm564, %v633, 0.0
      %v650 = vsel %vm564, %v634, 0.0
      %v651 = vsel %vm564, %v635, 0.0
      %v652 = vsel %vm564, %v636, 0.0
      %v653 = vsel %vm564, %v637, 0.0
      %v654 = vsel %vm564, %v638, 0.0
      %v655 = vsel %vm564, %v639, 0.0
      %v656 = vsel %vm564, %v640, 0.0
      %v657 = vsel %vm564, %v641, 0.0
      %v658 = vsel %vm564, %v642, 0.0
      %v659 = vsel %vm564, %v643, 0.0
      %v660 = vsel %vm564, %v644, 0.0
      %v661 = vmul.f32 %v645, %v645
      %v662 = vmul.f32 %v646, %v646
      %v663 = vmul.f32 %v647, %v647
      %v664 = vmul.f32 %v648, %v648
      %v665 = vmul.f32 %v649, %v649
      %v666 = vmul.f32 %v650, %v650
      %v667 = vmul.f32 %v651, %v651
      %v668 = vmul.f32 %v652, %v652
      %v669 = vmul.f32 %v653, %v653
      %v670 = vmul.f32 %v654, %v654
      %v671 = vmul.f32 %v655, %v655
      %v672 = vmul.f32 %v656, %v656
      %v673 = vmul.f32 %v657, %v657
      %v674 = vmul.f32 %v658, %v658
      %v675 = vmul.f32 %v659, %v659
      %v676 = vmul.f32 %v660, %v660
      %677 = vadd.xlane.f32.xlu0 %v661
      %v678 = vpop.xlane.xlu0 %677
      %679 = vadd.xlane.f32.xlu0 %v662
      %v680 = vpop.xlane.xlu0 %679
      %681 = vadd.xlane.f32.xlu0 %v663
      %v682 = vpop.xlane.xlu0 %681
      %683 = vadd.xlane.f32.xlu0 %v664
      %v684 = vpop.xlane.xlu0 %683
      %685 = vadd.xlane.f32.xlu0 %v665
      %v686 = vpop.xlane.xlu0 %685
      %687 = vadd.xlane.f32.xlu0 %v666
      %v688 = vpop.xlane.xlu0 %687
      %689 = vadd.xlane.f32.xlu0 %v667
      %v690 = vpop.xlane.xlu0 %689
      %691 = vadd.xlane.f32.xlu0 %v668
      %v692 = vpop.xlane.xlu0 %691
      %693 = vadd.xlane.f32.xlu0 %v669
      %v694 = vpop.xlane.xlu0 %693
      %695 = vadd.xlane.f32.xlu0 %v670
      %v696 = vpop.xlane.xlu0 %695
      %697 = vadd.xlane.f32.xlu0 %v671
      %v698 = vpop.xlane.xlu0 %697
      %699 = vadd.xlane.f32.xlu0 %v672
      %v700 = vpop.xlane.xlu0 %699
      %701 = vadd.xlane.f32.xlu0 %v673
      %v702 = vpop.xlane.xlu0 %701
      %703 = vadd.xlane.f32.xlu0 %v674
      %v704 = vpop.xlane.xlu0 %703
      %705 = vadd.xlane.f32.xlu0 %v675
      %v706 = vpop.xlane.xlu0 %705
      %707 = vadd.xlane.f32.xlu0 %v676
      %v708 = vpop.xlane.xlu0 %707
      %v709 = vmul.f32 %v678, 0.03125
      %v710 = vmul.f32 %v680, 0.03125
      %v711 = vmul.f32 %v682, 0.03125
      %v712 = vmul.f32 %v684, 0.03125
      %v713 = vmul.f32 %v686, 0.03125
      %v714 = vmul.f32 %v688, 0.03125
      %v715 = vmul.f32 %v690, 0.03125
      %v716 = vmul.f32 %v692, 0.03125
      %v717 = vmul.f32 %v694, 0.03125
      %v718 = vmul.f32 %v696, 0.03125
      %v719 = vmul.f32 %v698, 0.03125
      %v720 = vmul.f32 %v700, 0.03125
      %v721 = vmul.f32 %v702, 0.03125
      %v722 = vmul.f32 %v704, 0.03125
      %v723 = vmul.f32 %v706, 0.03125
      %v724 = vmul.f32 %v708, 0.03125
      %v725 = vadd.f32 %v709, 1e-05
      %v726 = vadd.f32 %v710, 1e-05
      %v727 = vadd.f32 %v711, 1e-05
      %v728 = vadd.f32 %v712, 1e-05
      %v729 = vadd.f32 %v713, 1e-05
      %v730 = vadd.f32 %v714, 1e-05
      %v731 = vadd.f32 %v715, 1e-05
      %v732 = vadd.f32 %v716, 1e-05
      %v733 = vadd.f32 %v717, 1e-05
      %v734 = vadd.f32 %v718, 1e-05
      %v735 = vadd.f32 %v719, 1e-05
      %v736 = vadd.f32 %v720, 1e-05
      %v737 = vadd.f32 %v721, 1e-05
      %v738 = vadd.f32 %v722, 1e-05
      %v739 = vadd.f32 %v723, 1e-05
      %v740 = vadd.f32 %v724, 1e-05
      %v741 = vrsqrt.pop %v725
      %v742 = vrsqrt.pop %v726
      %v743 = vrsqrt.pop %v727
      %v744 = vrsqrt.pop %v728
      %v745 = vrsqrt.pop %v729
      %v746 = vrsqrt.pop %v730
      %v747 = vrsqrt.pop %v731
      %v748 = vrsqrt.pop %v732
      %v749 = vrsqrt.pop %v733
      %v750 = vrsqrt.pop %v734
      %v751 = vrsqrt.pop %v735
      %v752 = vrsqrt.pop %v736
      %v753 = vrsqrt.pop %v737
      %v754 = vrsqrt.pop %v738
      %v755 = vrsqrt.pop %v739
      %v756 = vrsqrt.pop %v740
      %v757 = vmul.f32 %v645, %v741
      %v758 = vmul.f32 %v646, %v742
      %v759 = vmul.f32 %v647, %v743
      %v760 = vmul.f32 %v648, %v744
      %v761 = vmul.f32 %v649, %v745
      %v762 = vmul.f32 %v650, %v746
      %v763 = vmul.f32 %v651, %v747
      %v764 = vmul.f32 %v652, %v748
      %v765 = vmul.f32 %v653, %v749
      %v766 = vmul.f32 %v654, %v750
      %v767 = vmul.f32 %v655, %v751
      %v768 = vmul.f32 %v656, %v752
      %v769 = vmul.f32 %v657, %v753
      %v770 = vmul.f32 %v658, %v754
      %v771 = vmul.f32 %v659, %v755
      %v772 = vmul.f32 %v660, %v756
      %v773 = vld [vmem:[%s5] sm:$0x1]
      %v775 = vlaneseq
      %v776 = vshrl.u32 %v775, 7
      %v777 = vsub.s32 0, %v776
      %v778 = vrot.slane %v773, %v777
      %v780 = vmul.f32 %v757, %v778
      %v781 = vmul.f32 %v758, %v778
      %v782 = vmul.f32 %v759, %v778
      %v783 = vmul.f32 %v760, %v778
      %v784 = vmul.f32 %v761, %v778
      %v785 = vmul.f32 %v762, %v778
      %v786 = vmul.f32 %v763, %v778
      %v787 = vmul.f32 %v764, %v778
      %v788 = vmul.f32 %v765, %v778
      %v789 = vmul.f32 %v766, %v778
      %v790 = vmul.f32 %v767, %v778
      %v791 = vmul.f32 %v768, %v778
      %v792 = vmul.f32 %v769, %v778
      %v793 = vmul.f32 %v770, %v778
      %v794 = vmul.f32 %v771, %v778
      %v795 = vmul.f32 %v772, %v778
      %v796 = vld [vmem:[%s6] sm:$0x1]
      %v798 = vlaneseq
      %v799 = vshrl.u32 %v798, 7
      %v800 = vsub.s32 0, %v799
      %v801 = vrot.slane %v796, %v800
      %v803 = vadd.f32 %v780, %v801
      %v804 = vadd.f32 %v781, %v801
      %v805 = vadd.f32 %v782, %v801
      %v806 = vadd.f32 %v783, %v801
      %v807 = vadd.f32 %v784, %v801
      %v808 = vadd.f32 %v785, %v801
      %v809 = vadd.f32 %v786, %v801
      %v810 = vadd.f32 %v787, %v801
      %v811 = vadd.f32 %v788, %v801
      %v812 = vadd.f32 %v789, %v801
      %v813 = vadd.f32 %v790, %v801
      %v814 = vadd.f32 %v791, %v801
      %v815 = vadd.f32 %v792, %v801
      %v816 = vadd.f32 %v793, %v801
      %v817 = vadd.f32 %v794, %v801
      %v818 = vadd.f32 %v795, %v801
      %v819 = vmax.f32 %v803, 0.0
      %v820 = vmax.f32 %v804, 0.0
      %v821 = vmax.f32 %v805, 0.0
      %v822 = vmax.f32 %v806, 0.0
      %v823 = vmax.f32 %v807, 0.0
      %v824 = vmax.f32 %v808, 0.0
      %v825 = vmax.f32 %v809, 0.0
      %v826 = vmax.f32 %v810, 0.0
      %v827 = vmax.f32 %v811, 0.0
      %v828 = vmax.f32 %v812, 0.0
      %v829 = vmax.f32 %v813, 0.0
      %v830 = vmax.f32 %v814, 0.0
      %v831 = vmax.f32 %v815, 0.0
      %v832 = vmax.f32 %v816, 0.0
      %v833 = vmax.f32 %v817, 0.0
      %v834 = vmax.f32 %v818, 0.0
      %835 = vst [vmem:[#allocation11] sm:$0xff] %v819
      %836 = vst [vmem:[#allocation11 + $0x8] sm:$0xff] %v820
      %837 = vst [vmem:[#allocation11 + $0x10] sm:$0xff] %v821
      %838 = vst [vmem:[#allocation11 + $0x18] sm:$0xff] %v822
      %839 = vst [vmem:[#allocation11 + $0x20] sm:$0xff] %v823
      %840 = vst [vmem:[#allocation11 + $0x28] sm:$0xff] %v824
      %841 = vst [vmem:[#allocation11 + $0x30] sm:$0xff] %v825
      %842 = vst [vmem:[#allocation11 + $0x38] sm:$0xff] %v826
      %843 = vst [vmem:[#allocation11 + $0x40] sm:$0xff] %v827
      %844 = vst [vmem:[#allocation11 + $0x48] sm:$0xff] %v828
      %845 = vst [vmem:[#allocation11 + $0x50] sm:$0xff] %v829
      %846 = vst [vmem:[#allocation11 + $0x58] sm:$0xff] %v830
      %847 = vst [vmem:[#allocation11 + $0x60] sm:$0xff] %v831
      %848 = vst [vmem:[#allocation11 + $0x68] sm:$0xff] %v832
      %849 = vst [vmem:[#allocation11 + $0x70] sm:$0xff] %v833
      %850 = vst [vmem:[#allocation11 + $0x78] sm:$0xff] %v834
    $region53: #{tpu_custom_call.1} parent=1 // pred_fallthru
      _
    // Predicated region
    $region54: #{tpu_custom_call.1} parent=1 // pred_check
      _
    $region55: #{tpu_custom_call.1} parent=1 // pred_check_branch
      %852 = sbr.rel (0) target = $region57
    $region56: #{tpu_custom_call.1} parent=1 // pred_region
      %s854 = ssub.s32 2048, 2048
      %855 = vsyncadd [#allocation5], %s854
      %s856 = sshll.u32 [#allocation11], 4
      %s857 = int_to_ptr.vmem [resolvable:$true] %s856
      %862 = dma.vmem_to_hbm [thread:$0]  %s857, 2048, %s7, [#allocation5], 128, 128, 8
    $region57: #{tpu_custom_call.1} parent=1 // pred_fallthru
      _
    // Predicated region
    $region58: #{tpu_custom_call.1} parent=1 // pred_check
      _
    $region59: #{tpu_custom_call.1} parent=1 // pred_check_branch
      %864 = sbr.rel (0) target = $region61
    $region60: #{tpu_custom_call.1} parent=1 // pred_region
      %865 = dma.done [#allocation5], 2048
    $region61: #{tpu_custom_call.1} parent=1 // pred_fallthru
      _
    %866 = vsyncpa [#allocation4], 1
    %867 = vsyncpa [#allocation7], 1
    %868 = vsyncpa [#allocation10], 1
    %869 = vsyncpa [#allocation5], 1

</llo_original>
